<compile_context>
chip_gen: v7x
topology: tpu7x:2x2x1
jax: 0.10.0
libtpu: 0.0.40
codegen_flags: <defaults>
</compile_context>

<pallas_src>
import functools

import jax
import jax.numpy as jnp
from jax.experimental import pallas as pl
from jax.experimental.pallas import tpu as pltpu


def _embed_kernel(idx_ref, table_ref, logits_ref):
    # idx_ref: (N,) int32 SMEM; table_ref: (Vp, Vp) f32 VMEM;
    # logits_ref: (N, Vp) f32 VMEM (lane-dense, Vp multiple of 128).
    N = logits_ref.shape[0]
    for i in range(N):  # N is small & static; fully unrolled row copies
        # Exact gather: dynamic sublane slice of one table row.
        logits_ref[pl.ds(i, 1), :] = table_ref[pl.ds(idx_ref[i], 1), :]


def _embed_ce_kernel(idx_ref, tgt_ref, table_ref, logits_ref, loss_ref,
                     *, valid_v: int):
    # idx_ref/tgt_ref: (N,) int32 SMEM; table_ref: (Vp, Vp) f32 VMEM
    # logits_ref: (N, Vp) f32 VMEM; loss_ref: (1, 1) f32 SMEM
    N, Vp = logits_ref.shape
    lane = jax.lax.broadcasted_iota(jnp.int32, (1, Vp), 1)      # hoisted iota

    # Row-wise exact gather + accumulation of the target logits.  Each row
    # contributes exactly one nonzero lane (targets < valid_v by contract, as
    # in PyTorch F.cross_entropy without ignore_index), so a single cross-lane
    # reduce at the end yields sum_i logits[i, tgt[i]].
    tgt_acc = jnp.zeros((1, Vp), jnp.float32)
    for i in range(N):
        row = table_ref[pl.ds(idx_ref[i], 1), :]                # (1, Vp) f32
        logits_ref[pl.ds(i, 1), :] = row                        # full-lane store
        tgt_acc = tgt_acc + jnp.where(lane == tgt_ref[i], row, 0.0)

    logits = logits_ref[...]                                    # (N, Vp)

    # Mean cross-entropy: mean_i( logsumexp(logits_i[:V]) - logits_i[tgt_i] ).
    # Padded lanes (>= valid_v) are zero-padded table columns; mask to -inf so
    # they cannot contribute to the logsumexp.
    lane_n = jax.lax.broadcasted_iota(jnp.int32, (N, Vp), 1)
    masked = jnp.where(lane_n < valid_v, logits, -jnp.inf)
    m = jnp.max(masked, axis=-1, keepdims=True)                 # (N, 1)
    lse = m + jnp.log(jnp.sum(jnp.exp(masked - m), axis=-1, keepdims=True))
    loss_ref[0, 0] = (jnp.sum(lse) - jnp.sum(tgt_acc)) / N


def pad_table(table):
    """One-time (model init) prep: f32 cast + zero-pad vocab dims to a 128-multiple."""
    V = table.shape[0]
    Vp = pl.cdiv(V, 128) * 128
    return jnp.pad(table.astype(jnp.float32), ((0, Vp - V), (0, Vp - V)))


@functools.partial(jax.jit, static_argnames=("vocab_size",))
def bigram_forward(idx, table_p, targets=None, *, vocab_size):
    """Mirrors BigramLanguageModel.forward (logits, loss)."""
    B, T = idx.shape
    N = B * T
    Vp = table_p.shape[1]
    idx_flat = idx.reshape(N).astype(jnp.int32)

    smem = pl.BlockSpec(memory_space=pltpu.MemorySpace.SMEM)
    vmem = pl.BlockSpec(memory_space=pltpu.MemorySpace.VMEM)

    if targets is None:
        logits_p = pl.pallas_call(
            _embed_kernel,
            out_shape=jax.ShapeDtypeStruct((N, Vp), jnp.float32),
            in_specs=[smem, vmem],
            out_specs=vmem,
        )(idx_flat, table_p)
        # Slice/reshape fuse with the pallas_call result under jit.
        return logits_p[:, :vocab_size].reshape(B, T, vocab_size), None

    tgt_flat = targets.reshape(N).astype(jnp.int32)
    logits_p, loss = pl.pallas_call(
        functools.partial(_embed_ce_kernel, valid_v=vocab_size),
        out_shape=(jax.ShapeDtypeStruct((N, Vp), jnp.float32),
                   jax.ShapeDtypeStruct((1, 1), jnp.float32)),
        in_specs=[smem, smem, vmem],
        out_specs=(vmem, smem),
    )(idx_flat, tgt_flat, table_p)
    # PyTorch returns the (B*T, C) view of logits in this branch.
    return logits_p[:, :vocab_size], loss[0, 0]


if __name__ == "__main__":
    vocab_size = 65   # e.g. tiny-shakespeare char vocab
    B, T = 2, 8

    key = jax.random.PRNGKey(0)
    k_tab, k_idx, k_tgt = jax.random.split(key, 3)
    # nn.Embedding default init: N(0, 1)
    table = jax.random.normal(k_tab, (vocab_size, vocab_size), dtype=jnp.float32)
    idx = jax.random.randint(k_idx, (B, T), 0, vocab_size, dtype=jnp.int32)
    targets = jax.random.randint(k_tgt, (B, T), 0, vocab_size, dtype=jnp.int32)

    # Hoisted to "model init": pad/cast the constant weight once.
    table_p = jax.block_until_ready(pad_table(table))

    # targets=None path
    logits_no_tgt, loss_none = bigram_forward(idx, table_p, None,
                                              vocab_size=vocab_size)
    logits_no_tgt = jax.block_until_ready(logits_no_tgt)
    assert logits_no_tgt.shape == (B, T, vocab_size)
    assert loss_none is None

    # targets path
    logits, loss = bigram_forward(idx, table_p, targets, vocab_size=vocab_size)
    logits, loss = jax.block_until_ready((logits, loss))
    assert logits.shape == (B * T, vocab_size)

    # pure-JAX reference check (row-copy gather is bit-exact, loss ~1e-6)
    ref_logits = table[idx].reshape(B * T, vocab_size)
    m = jnp.max(ref_logits, axis=-1, keepdims=True)
    lse = (m + jnp.log(jnp.sum(jnp.exp(ref_logits - m), axis=-1,
                               keepdims=True)))[:, 0]
    ref_loss = jnp.mean(lse - ref_logits[jnp.arange(B * T), targets.reshape(-1)])
    assert jnp.allclose(logits, ref_logits, atol=1e-6, rtol=1e-6)
    assert jnp.allclose(logits_no_tgt.reshape(B * T, vocab_size), ref_logits,
                        atol=1e-6, rtol=1e-6)
    assert jnp.allclose(loss, ref_loss, atol=1e-5, rtol=1e-5)

    # TODO(synk): generate() is a host-side autoregressive loop with
    # torch.multinomial sampling; not a kernel hot path, not translated.
    print("KERNEL_OK")
</pallas_src>

<mosaic_0001>
module attributes {stable_mosaic.version = 11 : i64} {
  func.func @_embed_kernel(%arg0: memref<16xi32, #tpu.memory_space<smem>>, %arg1: memref<128x128xf32, #tpu.memory_space<vmem>>, %arg2: memref<16x128xf32, #tpu.memory_space<vmem>>) attributes {dimension_semantics = [], scalar_prefetch = 0 : i64, scratch_operands = 0 : i64, tpu.core_type = #tpu.core_type<tc>} {
    %c0 = arith.constant 0 : index
    %0 = memref.load %arg0[%c0] : memref<16xi32, #tpu.memory_space<smem>>
    %1 = arith.index_cast %0 : i32 to index
    %c0_0 = arith.constant 0 : index
    %2 = vector.load %arg1[%1, %c0_0] : memref<128x128xf32, #tpu.memory_space<vmem>>, vector<1x128xf32>
    %c0_1 = arith.constant 0 : index
    %c0_2 = arith.constant 0 : index
    %3 = vector.load %arg2[%c0_1, %c0_2] : memref<16x128xf32, #tpu.memory_space<vmem>>, vector<1x128xf32>
    tpu.vector_store %arg2[%c0_1, %c0_2], %2 {strides = array<i32>} : memref<16x128xf32, #tpu.memory_space<vmem>>, vector<1x128xf32>,
    %c1 = arith.constant 1 : index
    %4 = memref.load %arg0[%c1] : memref<16xi32, #tpu.memory_space<smem>>
    %5 = arith.index_cast %4 : i32 to index
    %c0_3 = arith.constant 0 : index
    %6 = vector.load %arg1[%5, %c0_3] : memref<128x128xf32, #tpu.memory_space<vmem>>, vector<1x128xf32>
    %c1_4 = arith.constant 1 : index
    %c0_5 = arith.constant 0 : index
    %7 = vector.load %arg2[%c1_4, %c0_5] : memref<16x128xf32, #tpu.memory_space<vmem>>, vector<1x128xf32>
    tpu.vector_store %arg2[%c1_4, %c0_5], %6 {strides = array<i32>} : memref<16x128xf32, #tpu.memory_space<vmem>>, vector<1x128xf32>,
    %c2 = arith.constant 2 : index
    %8 = memref.load %arg0[%c2] : memref<16xi32, #tpu.memory_space<smem>>
    %9 = arith.index_cast %8 : i32 to index
    %c0_6 = arith.constant 0 : index
    %10 = vector.load %arg1[%9, %c0_6] : memref<128x128xf32, #tpu.memory_space<vmem>>, vector<1x128xf32>
    %c2_7 = arith.constant 2 : index
    %c0_8 = arith.constant 0 : index
    %11 = vector.load %arg2[%c2_7, %c0_8] : memref<16x128xf32, #tpu.memory_space<vmem>>, vector<1x128xf32>
    tpu.vector_store %arg2[%c2_7, %c0_8], %10 {strides = array<i32>} : memref<16x128xf32, #tpu.memory_space<vmem>>, vector<1x128xf32>,
    %c3 = arith.constant 3 : index
    %12 = memref.load %arg0[%c3] : memref<16xi32, #tpu.memory_space<smem>>
    %13 = arith.index_cast %12 : i32 to index
    %c0_9 = arith.constant 0 : index
    %14 = vector.load %arg1[%13, %c0_9] : memref<128x128xf32, #tpu.memory_space<vmem>>, vector<1x128xf32>
    %c3_10 = arith.constant 3 : index
    %c0_11 = arith.constant 0 : index
    %15 = vector.load %arg2[%c3_10, %c0_11] : memref<16x128xf32, #tpu.memory_space<vmem>>, vector<1x128xf32>
    tpu.vector_store %arg2[%c3_10, %c0_11], %14 {strides = array<i32>} : memref<16x128xf32, #tpu.memory_space<vmem>>, vector<1x128xf32>,
    %c4 = arith.constant 4 : index
    %16 = memref.load %arg0[%c4] : memref<16xi32, #tpu.memory_space<smem>>
    %17 = arith.index_cast %16 : i32 to index
    %c0_12 = arith.constant 0 : index
    %18 = vector.load %arg1[%17, %c0_12] : memref<128x128xf32, #tpu.memory_space<vmem>>, vector<1x128xf32>
    %c4_13 = arith.constant 4 : index
    %c0_14 = arith.constant 0 : index
    %19 = vector.load %arg2[%c4_13, %c0_14] : memref<16x128xf32, #tpu.memory_space<vmem>>, vector<1x128xf32>
    tpu.vector_store %arg2[%c4_13, %c0_14], %18 {strides = array<i32>} : memref<16x128xf32, #tpu.memory_space<vmem>>, vector<1x128xf32>,
    %c5 = arith.constant 5 : index
    %20 = memref.load %arg0[%c5] : memref<16xi32, #tpu.memory_space<smem>>
    %21 = arith.index_cast %20 : i32 to index
    %c0_15 = arith.constant 0 : index
    %22 = vector.load %arg1[%21, %c0_15] : memref<128x128xf32, #tpu.memory_space<vmem>>, vector<1x128xf32>
    %c5_16 = arith.constant 5 : index
    %c0_17 = arith.constant 0 : index
    %23 = vector.load %arg2[%c5_16, %c0_17] : memref<16x128xf32, #tpu.memory_space<vmem>>, vector<1x128xf32>
    tpu.vector_store %arg2[%c5_16, %c0_17], %22 {strides = array<i32>} : memref<16x128xf32, #tpu.memory_space<vmem>>, vector<1x128xf32>,
    %c6 = arith.constant 6 : index
    %24 = memref.load %arg0[%c6] : memref<16xi32, #tpu.memory_space<smem>>
    %25 = arith.index_cast %24 : i32 to index
    %c0_18 = arith.constant 0 : index
    %26 = vector.load %arg1[%25, %c0_18] : memref<128x128xf32, #tpu.memory_space<vmem>>, vector<1x128xf32>
    %c6_19 = arith.constant 6 : index
    %c0_20 = arith.constant 0 : index
    %27 = vector.load %arg2[%c6_19, %c0_20] : memref<16x128xf32, #tpu.memory_space<vmem>>, vector<1x128xf32>
    tpu.vector_store %arg2[%c6_19, %c0_20], %26 {strides = array<i32>} : memref<16x128xf32, #tpu.memory_space<vmem>>, vector<1x128xf32>,
    %c7 = arith.constant 7 : index
    %28 = memref.load %arg0[%c7] : memref<16xi32, #tpu.memory_space<smem>>
    %29 = arith.index_cast %28 : i32 to index
    %c0_21 = arith.constant 0 : index
    %30 = vector.load %arg1[%29, %c0_21] : memref<128x128xf32, #tpu.memory_space<vmem>>, vector<1x128xf32>
    %c7_22 = arith.constant 7 : index
    %c0_23 = arith.constant 0 : index
    %31 = vector.load %arg2[%c7_22, %c0_23] : memref<16x128xf32, #tpu.memory_space<vmem>>, vector<1x128xf32>
    tpu.vector_store %arg2[%c7_22, %c0_23], %30 {strides = array<i32>} : memref<16x128xf32, #tpu.memory_space<vmem>>, vector<1x128xf32>,
    %c8 = arith.constant 8 : index
    %32 = memref.load %arg0[%c8] : memref<16xi32, #tpu.memory_space<smem>>
    %33 = arith.index_cast %32 : i32 to index
    %c0_24 = arith.constant 0 : index
    %34 = vector.load %arg1[%33, %c0_24] : memref<128x128xf32, #tpu.memory_space<vmem>>, vector<1x128xf32>
    %c8_25 = arith.constant 8 : index
    %c0_26 = arith.constant 0 : index
    %35 = vector.load %arg2[%c8_25, %c0_26] : memref<16x128xf32, #tpu.memory_space<vmem>>, vector<1x128xf32>
    tpu.vector_store %arg2[%c8_25, %c0_26], %34 {strides = array<i32>} : memref<16x128xf32, #tpu.memory_space<vmem>>, vector<1x128xf32>,
    %c9 = arith.constant 9 : index
    %36 = memref.load %arg0[%c9] : memref<16xi32, #tpu.memory_space<smem>>
    %37 = arith.index_cast %36 : i32 to index
    %c0_27 = arith.constant 0 : index
    %38 = vector.load %arg1[%37, %c0_27] : memref<128x128xf32, #tpu.memory_space<vmem>>, vector<1x128xf32>
    %c9_28 = arith.constant 9 : index
    %c0_29 = arith.constant 0 : index
    %39 = vector.load %arg2[%c9_28, %c0_29] : memref<16x128xf32, #tpu.memory_space<vmem>>, vector<1x128xf32>
    tpu.vector_store %arg2[%c9_28, %c0_29], %38 {strides = array<i32>} : memref<16x128xf32, #tpu.memory_space<vmem>>, vector<1x128xf32>,
    %c10 = arith.constant 10 : index
    %40 = memref.load %arg0[%c10] : memref<16xi32, #tpu.memory_space<smem>>
    %41 = arith.index_cast %40 : i32 to index
    %c0_30 = arith.constant 0 : index
    %42 = vector.load %arg1[%41, %c0_30] : memref<128x128xf32, #tpu.memory_space<vmem>>, vector<1x128xf32>
    %c10_31 = arith.constant 10 : index
    %c0_32 = arith.constant 0 : index
    %43 = vector.load %arg2[%c10_31, %c0_32] : memref<16x128xf32, #tpu.memory_space<vmem>>, vector<1x128xf32>
    tpu.vector_store %arg2[%c10_31, %c0_32], %42 {strides = array<i32>} : memref<16x128xf32, #tpu.memory_space<vmem>>, vector<1x128xf32>,
    %c11 = arith.constant 11 : index
    %44 = memref.load %arg0[%c11] : memref<16xi32, #tpu.memory_space<smem>>
    %45 = arith.index_cast %44 : i32 to index
    %c0_33 = arith.constant 0 : index
    %46 = vector.load %arg1[%45, %c0_33] : memref<128x128xf32, #tpu.memory_space<vmem>>, vector<1x128xf32>
    %c11_34 = arith.constant 11 : index
    %c0_35 = arith.constant 0 : index
    %47 = vector.load %arg2[%c11_34, %c0_35] : memref<16x128xf32, #tpu.memory_space<vmem>>, vector<1x128xf32>
    tpu.vector_store %arg2[%c11_34, %c0_35], %46 {strides = array<i32>} : memref<16x128xf32, #tpu.memory_space<vmem>>, vector<1x128xf32>,
    %c12 = arith.constant 12 : index
    %48 = memref.load %arg0[%c12] : memref<16xi32, #tpu.memory_space<smem>>
    %49 = arith.index_cast %48 : i32 to index
    %c0_36 = arith.constant 0 : index
    %50 = vector.load %arg1[%49, %c0_36] : memref<128x128xf32, #tpu.memory_space<vmem>>, vector<1x128xf32>
    %c12_37 = arith.constant 12 : index
    %c0_38 = arith.constant 0 : index
    %51 = vector.load %arg2[%c12_37, %c0_38] : memref<16x128xf32, #tpu.memory_space<vmem>>, vector<1x128xf32>
    tpu.vector_store %arg2[%c12_37, %c0_38], %50 {strides = array<i32>} : memref<16x128xf32, #tpu.memory_space<vmem>>, vector<1x128xf32>,
    %c13 = arith.constant 13 : index
    %52 = memref.load %arg0[%c13] : memref<16xi32, #tpu.memory_space<smem>>
    %53 = arith.index_cast %52 : i32 to index
    %c0_39 = arith.constant 0 : index
    %54 = vector.load %arg1[%53, %c0_39] : memref<128x128xf32, #tpu.memory_space<vmem>>, vector<1x128xf32>
    %c13_40 = arith.constant 13 : index
    %c0_41 = arith.constant 0 : index
    %55 = vector.load %arg2[%c13_40, %c0_41] : memref<16x128xf32, #tpu.memory_space<vmem>>, vector<1x128xf32>
    tpu.vector_store %arg2[%c13_40, %c0_41], %54 {strides = array<i32>} : memref<16x128xf32, #tpu.memory_space<vmem>>, vector<1x128xf32>,
    %c14 = arith.constant 14 : index
    %56 = memref.load %arg0[%c14] : memref<16xi32, #tpu.memory_space<smem>>
    %57 = arith.index_cast %56 : i32 to index
    %c0_42 = arith.constant 0 : index
    %58 = vector.load %arg1[%57, %c0_42] : memref<128x128xf32, #tpu.memory_space<vmem>>, vector<1x128xf32>
    %c14_43 = arith.constant 14 : index
    %c0_44 = arith.constant 0 : index
    %59 = vector.load %arg2[%c14_43, %c0_44] : memref<16x128xf32, #tpu.memory_space<vmem>>, vector<1x128xf32>
    tpu.vector_store %arg2[%c14_43, %c0_44], %58 {strides = array<i32>} : memref<16x128xf32, #tpu.memory_space<vmem>>, vector<1x128xf32>,
    %c15 = arith.constant 15 : index
    %60 = memref.load %arg0[%c15] : memref<16xi32, #tpu.memory_space<smem>>
    %61 = arith.index_cast %60 : i32 to index
    %c0_45 = arith.constant 0 : index
    %62 = vector.load %arg1[%61, %c0_45] : memref<128x128xf32, #tpu.memory_space<vmem>>, vector<1x128xf32>
    %c15_46 = arith.constant 15 : index
    %c0_47 = arith.constant 0 : index
    %63 = vector.load %arg2[%c15_46, %c0_47] : memref<16x128xf32, #tpu.memory_space<vmem>>, vector<1x128xf32>
    tpu.vector_store %arg2[%c15_46, %c0_47], %62 {strides = array<i32>} : memref<16x128xf32, #tpu.memory_space<vmem>>, vector<1x128xf32>,
    return
  }
}

</mosaic_0001>

<llo_original>
// kernel: bigram_forward.1
$region0: #{bigram_forward.1}
  #allocation0 [shape = 'u32[]', space=smem, size = 0x4, offset = 0x4, fixed_abs, tag = 'smem constant byte address 0x4 - core index']
  #allocation1 [shape = 'u32[144,128]{1,0:T(1,128)}', space=vmem, size = 0x12000, scoped, tag = 'internal scratch']
  %s0 = inlined_call_operand.vmem [shape: s32[16], index: 0, kind: input, shape index: {}]
  %s1 = inlined_call_operand.hbm [shape: f32[128,128], index: 1, kind: input, shape index: {}]
  %s2 = inlined_call_operand.vmem [shape: f32[16,128], index: 2, kind: output, shape index: {}]
  %s3 = sld [smem:[#allocation0]]
  $region26: #{bigram_forward.1} parent=0
    _
  %s5 = ssub.s32 1, %s3
  %s6 = scalar_select 0, %s5, %s3
  $region1: #{bigram_forward.1} parent=0
    #allocation2 [shape = 'u8[512]{0}', space=smem, size = 0x200, scoped, tag = 'input window, operand 0, single buffered']
    #allocation3 [shape = 's32[1]{0}', space=sflag, size = 0x4, scoped, tag = 'scoped memory for bigram_forward.1']
    #allocation4 [shape = 's32[1]{0}', space=sflag, size = 0x4, scoped, tag = 'scoped memory for bigram_forward.1']
    #allocation5 [shape = 'u8[65536]{0}', space=vmem, size = 0x10000, scoped, tag = 'input window, operand 1, single buffered']
    %7 = vsyncpa [#allocation4], 0
    %8 = vsyncpa [#allocation3], 0
    // Predicated region
    $region2: #{bigram_forward.1} parent=1 // pred_check
      _
    $region3: #{bigram_forward.1} parent=1 // pred_check_branch
      %10 = sbr.rel (0) target = $region5
    $region4: #{bigram_forward.1} parent=1 // pred_region
      %s12 = ssub.s32 16, 16
      %13 = vsyncadd [#allocation4], %s12
      %s15 = sshll.u32 %s0, 4
      %s16 = int_to_ptr.vmem [resolvable:$true] %s15
      %18 = dma.vmem_to_smem %s16, 16, [#allocation2], [#allocation4]
    $region5: #{bigram_forward.1} parent=1 // pred_fallthru
      _
    // Predicated region
    $region6: #{bigram_forward.1} parent=1 // pred_check
      _
    $region7: #{bigram_forward.1} parent=1 // pred_check_branch
      %20 = sbr.rel (0) target = $region9
    $region8: #{bigram_forward.1} parent=1 // pred_region
      %s22 = ssub.s32 2048, 2048
      %23 = vsyncadd [#allocation3], %s22
      %s24 = sshll.u32 [#allocation5], 4
      %s25 = int_to_ptr.vmem [resolvable:$true] %s24
      %30 = dma.hbm_to_vmem [thread:$0]  %s1, 2048, %s25, [#allocation3], 128, 128, 8
    $region9: #{bigram_forward.1} parent=1 // pred_fallthru
      _
    // Predicated region
    $region10: #{bigram_forward.1} parent=1 // pred_check
      _
    $region11: #{bigram_forward.1} parent=1 // pred_check_branch
      %32 = sbr.rel (0) target = $region13
    $region12: #{bigram_forward.1} parent=1 // pred_region
      %33 = dma.done [#allocation4], 16
    $region13: #{bigram_forward.1} parent=1 // pred_fallthru
      _
    // Predicated region
    $region14: #{bigram_forward.1} parent=1 // pred_check
      _
    $region15: #{bigram_forward.1} parent=1 // pred_check_branch
      %35 = sbr.rel (0) target = $region17
    $region16: #{bigram_forward.1} parent=1 // pred_region
      %36 = dma.done [#allocation3], 2048
    $region17: #{bigram_forward.1} parent=1 // pred_fallthru
      _
    %37 = sfence
    %s38 = sld [smem:[#allocation2]]
    %s39 = scalar_lea.vmem [#allocation5], %s38
    %v40 = vld [vmem:[%s39] sm:$0x1]
    %41 = vst [vmem:[%s2] sm:$0x1] %v40
    %s42 = sld [smem:[#allocation2 + $0x1]]
    %s43 = scalar_lea.vmem [#allocation5], %s42
    %v44 = vld [vmem:[%s43] sm:$0x1]
    %45 = vst [vmem:[%s2 + $0x1] sm:$0x1] %v44
    %s46 = sld [smem:[#allocation2 + $0x2]]
    %s47 = scalar_lea.vmem [#allocation5], %s46
    %v48 = vld [vmem:[%s47] sm:$0x1]
    %49 = vst [vmem:[%s2 + $0x2] sm:$0x1] %v48
    %s50 = sld [smem:[#allocation2 + $0x3]]
    %s51 = scalar_lea.vmem [#allocation5], %s50
    %v52 = vld [vmem:[%s51] sm:$0x1]
    %53 = vst [vmem:[%s2 + $0x3] sm:$0x1] %v52
    %s54 = sld [smem:[#allocation2 + $0x4]]
    %s55 = scalar_lea.vmem [#allocation5], %s54
    %v56 = vld [vmem:[%s55] sm:$0x1]
    %57 = vst [vmem:[%s2 + $0x4] sm:$0x1] %v56
    %s58 = sld [smem:[#allocation2 + $0x5]]
    %s59 = scalar_lea.vmem [#allocation5], %s58
    %v60 = vld [vmem:[%s59] sm:$0x1]
    %61 = vst [vmem:[%s2 + $0x5] sm:$0x1] %v60
    %s62 = sld [smem:[#allocation2 + $0x6]]
    %s63 = scalar_lea.vmem [#allocation5], %s62
    %v64 = vld [vmem:[%s63] sm:$0x1]
    %65 = vst [vmem:[%s2 + $0x6] sm:$0x1] %v64
    %s66 = sld [smem:[#allocation2 + $0x7]]
    %s67 = scalar_lea.vmem [#allocation5], %s66
    %v68 = vld [vmem:[%s67] sm:$0x1]
    %69 = vst [vmem:[%s2 + $0x7] sm:$0x1] %v68
    %s70 = sld [smem:[#allocation2 + $0x8]]
    %s71 = scalar_lea.vmem [#allocation5], %s70
    %v72 = vld [vmem:[%s71] sm:$0x1]
    %73 = vst [vmem:[%s2 + $0x8] sm:$0x1] %v72
    %s74 = sld [smem:[#allocation2 + $0x9]]
    %s75 = scalar_lea.vmem [#allocation5], %s74
    %v76 = vld [vmem:[%s75] sm:$0x1]
    %77 = vst [vmem:[%s2 + $0x9] sm:$0x1] %v76
    %s78 = sld [smem:[#allocation2 + $0xa]]
    %s79 = scalar_lea.vmem [#allocation5], %s78
    %v80 = vld [vmem:[%s79] sm:$0x1]
    %81 = vst [vmem:[%s2 + $0xa] sm:$0x1] %v80
    %s82 = sld [smem:[#allocation2 + $0xb]]
    %s83 = scalar_lea.vmem [#allocation5], %s82
    %v84 = vld [vmem:[%s83] sm:$0x1]
    %85 = vst [vmem:[%s2 + $0xb] sm:$0x1] %v84
    %s86 = sld [smem:[#allocation2 + $0xc]]
    %s87 = scalar_lea.vmem [#allocation5], %s86
    %v88 = vld [vmem:[%s87] sm:$0x1]
    %89 = vst [vmem:[%s2 + $0xc] sm:$0x1] %v88
    %s90 = sld [smem:[#allocation2 + $0xd]]
    %s91 = scalar_lea.vmem [#allocation5], %s90
    %v92 = vld [vmem:[%s91] sm:$0x1]
    %93 = vst [vmem:[%s2 + $0xd] sm:$0x1] %v92
    %s94 = sld [smem:[#allocation2 + $0xe]]
    %s95 = scalar_lea.vmem [#allocation5], %s94
    %v96 = vld [vmem:[%s95] sm:$0x1]
    %97 = vst [vmem:[%s2 + $0xe] sm:$0x1] %v96
    %s98 = sld [smem:[#allocation2 + $0xf]]
    %s99 = scalar_lea.vmem [#allocation5], %s98
    %v100 = vld [vmem:[%s99] sm:$0x1]
    %101 = vst [vmem:[%s2 + $0xf] sm:$0x1] %v100
    // Predicated region
    $region18: #{bigram_forward.1} parent=1 // pred_check
      _
    $region19: #{bigram_forward.1} parent=1 // pred_check_branch
      %103 = sbr.rel (0) target = $region21
    $region20: #{bigram_forward.1} parent=1 // pred_region
      _
    $region21: #{bigram_forward.1} parent=1 // pred_fallthru
      _
    // Predicated region
    $region22: #{bigram_forward.1} parent=1 // pred_check
      _
    $region23: #{bigram_forward.1} parent=1 // pred_check_branch
      %105 = sbr.rel (0) target = $region25
    $region24: #{bigram_forward.1} parent=1 // pred_region
      _
    $region25: #{bigram_forward.1} parent=1 // pred_fallthru
      _
    %106 = vsyncpa [#allocation3], 1
    %107 = vsyncpa [#allocation4], 1

</llo_original>
